<compile_context>
chip_gen: v7x
topology: tpu7x:2x2x1
jax: 0.10.0
libtpu: 0.0.40
codegen_flags: <defaults>
</compile_context>

<pallas_src>
import functools

import jax
import jax.numpy as jnp
from jax.experimental import pallas as pl
from jax.experimental.pallas import tpu as pltpu


def gin_conv_kernel(eps, a_ref, feat_src_ref, feat_dst_ref, inv_deg_ref,
                    w_ref, b_ref, out_ref, acc_ref):
    """Grid = (dst-row tiles, src tiles). Reduction over the src axis (last)."""
    k = pl.program_id(1)

    @pl.when(k == 0)
    def _init():
        acc_ref[...] = jnp.zeros_like(acc_ref)

    # Partial neighbor sum for this src tile:  A[i-rows, k-cols] @ feat[k-rows, :]
    # A is stored bf16 (exact 0/1); cast up so accumulation stays full f32.
    a = a_ref[...].astype(jnp.float32)                       # [TM, TK]
    acc_ref[...] += jnp.dot(a, feat_src_ref[...],
                            preferred_element_type=jnp.float32)

    @pl.when(k == pl.num_programs(1) - 1)
    def _finalize():
        neigh = acc_ref[...] * inv_deg_ref[...]              # mean aggregation
        rst = (1.0 + eps) * feat_dst_ref[...] + neigh        # GIN update
        out_ref[...] = (
            jnp.dot(rst, w_ref[...], preferred_element_type=jnp.float32)
            + b_ref[...]
        ).astype(out_ref.dtype)
        # TODO(synk): residual=False / learn_eps=False as in the default
        # constructor; an identity residual would just add feat_dst here and a
        # linear residual would be one more matmul against a second weight.


def _round_up(x, m):
    return ((x + m - 1) // m) * m


def gin_conv_forward(adj, feat, weight, bias, eps, *, tile=None):
    """GINConv forward.

    adj:    [N, N] float, adj[i, j] = 1 iff edge j -> i (dense adjacency)
    feat:   [N, Din] f32 node features
    weight: [Dout, Din] f32 (torch nn.Linear layout)
    bias:   [Dout] f32
    eps:    python scalar (fixed buffer, learn_eps=False)
    Returns [N, Dout] f32.
    """
    n, d_in = feat.shape
    d_out = weight.shape[0]

    # Lane-dense padding of feature / output axes (full 128-lane vregs, full MXU K).
    d_in_p = _round_up(d_in, 128)
    d_out_p = _round_up(d_out, 128)

    # One tile size for both the dst-row and src (reduction) axes of A.
    # 512x512 bf16 A tiles = 512 KiB per buffer: comfortable even on v7x VMEM.
    if tile is None:
        tile = min(512, _round_up(max(n, 8), 128))
    n_p = _round_up(n, tile)

    # Precompute inverse in-degree in the wrapper (removes per-tile XLU row-sum
    # and divide from the reduction loop).  Isolated nodes -> 1/1, but their
    # neighbor sum is 0, so neigh stays 0 — matching the DGL mean reducer.
    deg = jnp.sum(adj.astype(jnp.float32), axis=1, keepdims=True)
    inv_deg = (1.0 / jnp.maximum(deg, 1.0)).astype(jnp.float32)

    # Pad + shrink adjacency dtype (0/1 is exact in bf16 -> halves HBM bytes).
    adj_p = jnp.zeros((n_p, n_p), jnp.bfloat16).at[:n, :n].set(
        adj.astype(jnp.bfloat16))
    feat_p = jnp.zeros((n_p, d_in_p), jnp.float32).at[:n, :d_in].set(
        feat.astype(jnp.float32))
    inv_deg_p = jnp.zeros((n_p, 1), jnp.float32).at[:n, :].set(inv_deg)
    w_t_p = jnp.zeros((d_in_p, d_out_p), jnp.float32).at[:d_in, :d_out].set(
        weight.astype(jnp.float32).T)
    b_p = jnp.zeros((1, d_out_p), jnp.float32).at[:, :d_out].set(
        bias.astype(jnp.float32).reshape(1, -1))

    grid = (n_p // tile, n_p // tile)

    flops = 2 * n_p * n_p * d_in_p + 2 * n_p * d_in_p * d_out_p
    bytes_accessed = (adj_p.size * 2                 # bf16 adjacency
                      + 2 * feat_p.size * 4          # feat read as src and dst
                      + inv_deg_p.size * 4
                      + w_t_p.size * 4 + b_p.size * 4
                      + n_p * d_out_p * 4)           # output

    kernel = functools.partial(gin_conv_kernel, float(eps))

    out_p = pl.pallas_call(
        kernel,
        out_shape=jax.ShapeDtypeStruct((n_p, d_out_p), jnp.float32),
        grid=grid,
        in_specs=[
            pl.BlockSpec((tile, tile), lambda i, k: (i, k)),         # A tile (bf16)
            pl.BlockSpec((tile, d_in_p), lambda i, k: (k, 0)),       # feat (src rows)
            pl.BlockSpec((tile, d_in_p), lambda i, k: (i, 0)),       # feat (dst rows)
            pl.BlockSpec((tile, 1), lambda i, k: (i, 0)),            # inv in-degree
            pl.BlockSpec((d_in_p, d_out_p), lambda i, k: (0, 0)),    # W^T
            pl.BlockSpec((1, d_out_p), lambda i, k: (0, 0)),         # bias
        ],
        out_specs=pl.BlockSpec((tile, d_out_p), lambda i, k: (i, 0)),
        scratch_shapes=[pltpu.VMEM((tile, d_in_p), jnp.float32)],    # neigh accumulator
        compiler_params=pltpu.CompilerParams(
            dimension_semantics=("parallel", "arbitrary"),
            vmem_limit_bytes=48 << 20,
        ),
        cost_estimate=pl.CostEstimate(
            flops=flops, transcendentals=0, bytes_accessed=bytes_accessed),
    )(adj_p, feat_p, feat_p, inv_deg_p, w_t_p, b_p)

    # TODO(synk): block-sparsity skipping of empty A tiles (scalar-prefetched
    # per-tile nnz + pl.when) and multi-graph batching are left out; they only
    # pay off for large, genuinely sparse graphs.
    return out_p[:n, :d_out]


def reference(adj, feat, weight, bias, eps):
    deg = jnp.sum(adj, axis=1, keepdims=True)
    neigh = (adj @ feat) / jnp.maximum(deg, 1.0)
    rst = (1.0 + eps) * feat + neigh
    return rst @ weight.T + bias


if __name__ == "__main__":
    key = jax.random.PRNGKey(0)
    k_adj, k_feat, k_w, k_b = jax.random.split(key, 4)

    # Small but tiling-exercising sizes: grid = (2, 2), Din/Dout padded to 128.
    N, D_IN, D_OUT = 256, 96, 80
    EPS = 0.0  # init_eps=0, learn_eps=False

    # Random directed graph as dense adjacency (A[i, j] = 1 iff edge j -> i).
    adj = (jax.random.uniform(k_adj, (N, N)) < 0.1).astype(jnp.float32)
    feat = jax.random.normal(k_feat, (N, D_IN), dtype=jnp.float32)

    # apply_func = nn.Linear(D_IN, D_OUT) parameters (torch layout [Dout, Din]).
    bound = 1.0 / (D_IN ** 0.5)
    weight = jax.random.uniform(
        k_w, (D_OUT, D_IN), minval=-bound, maxval=bound, dtype=jnp.float32)
    bias = jax.random.uniform(
        k_b, (D_OUT,), minval=-bound, maxval=bound, dtype=jnp.float32)

    out = gin_conv_forward(adj, feat, weight, bias, EPS, tile=128)
    out = jax.block_until_ready(out)

    ref = reference(adj, feat, weight, bias, EPS)
    assert out.shape == (N, D_OUT), f"bad shape {out.shape}"
    assert jnp.allclose(out, ref, atol=1e-4, rtol=1e-4), (
        "mismatch vs reference, max abs diff = "
        f"{float(jnp.max(jnp.abs(out - ref)))}")

    print("KERNEL_OK")
</pallas_src>

<mosaic_0001>
module attributes {stable_mosaic.version = 11 : i64} {
  func.func @gin_conv_kernel(%arg0: i32, %arg1: i32, %arg2: memref<128x128xbf16, #tpu.memory_space<vmem>>, %arg3: memref<128x128xf32, #tpu.memory_space<vmem>>, %arg4: memref<128x128xf32, #tpu.memory_space<vmem>>, %arg5: memref<128x1xf32, #tpu.memory_space<vmem>>, %arg6: memref<128x128xf32, #tpu.memory_space<vmem>>, %arg7: memref<1x128xf32, #tpu.memory_space<vmem>>, %arg8: memref<128x128xf32, #tpu.memory_space<vmem>>, %arg9: memref<128x128xf32, #tpu.memory_space<vmem>>) attributes {dimension_semantics = [#tpu.dimension_semantics<parallel>, #tpu.dimension_semantics<arbitrary>], iteration_bounds = array<i64: 2, 2>, scalar_prefetch = 0 : i64, scratch_operands = 1 : i64, tpu.core_type = #tpu.core_type<tc>, window_params = [{transform_indices = @transform_0, window_bounds = array<i64: 128, 128>}, {transform_indices = @transform_1, window_bounds = array<i64: 128, 128>}, {transform_indices = @transform_2, window_bounds = array<i64: 128, 128>}, {transform_indices = @transform_3, window_bounds = array<i64: 128, 1>}, {pipeline_mode = #tpu.pipeline_mode<synchronous>, transform_indices = @transform_4, window_bounds = array<i64: 128, 128>}, {pipeline_mode = #tpu.pipeline_mode<synchronous>, transform_indices = @transform_5, window_bounds = array<i64: 1, 128>}, {transform_indices = @transform_6, window_bounds = array<i64: 128, 128>}]} {
    %c0_i32 = arith.constant 0 : i32
    %0 = arith.cmpi eq, %arg1, %c0_i32 : i32
    %1 = arith.extui %0 : i1 to i32
    %c0_i32_0 = arith.constant 0 : i32
    %2 = arith.cmpi ne, %1, %c0_i32_0 : i32
    scf.if %2 {
      %cst_9 = arith.constant 0.000000e+00 : f32
      %13 = vector.broadcast %cst_9 : f32 to vector<128x128xf32>
      %c0_10 = arith.constant 0 : index
      %c0_11 = arith.constant 0 : index
      %14 = vector.load %arg9[%c0_10, %c0_11] : memref<128x128xf32, #tpu.memory_space<vmem>>, vector<128x128xf32>
      tpu.vector_store %arg9[%c0_10, %c0_11], %13 {strides = array<i32>} : memref<128x128xf32, #tpu.memory_space<vmem>>, vector<128x128xf32>,
    } else {
    }
    %c0 = arith.constant 0 : index
    %c0_1 = arith.constant 0 : index
    %3 = vector.load %arg2[%c0, %c0_1] : memref<128x128xbf16, #tpu.memory_space<vmem>>, vector<128x128xbf16>
    %4 = arith.extf %3 : vector<128x128xbf16> to vector<128x128xf32>
    %c0_2 = arith.constant 0 : index
    %c0_3 = arith.constant 0 : index
    %5 = vector.load %arg9[%c0_2, %c0_3] : memref<128x128xf32, #tpu.memory_space<vmem>>, vector<128x128xf32>
    %c0_4 = arith.constant 0 : index
    %c0_5 = arith.constant 0 : index
    %6 = vector.load %arg3[%c0_4, %c0_5] : memref<128x128xf32, #tpu.memory_space<vmem>>, vector<128x128xf32>
    %cst = arith.constant dense<0.000000e+00> : vector<128x128xf32>
    %7 = tpu.matmul %4, %6, %cst {dimension_numbers = #tpu.dot_dimension_numbers<[1], [0], [0], [1], [0, 0, 1, 1], [], []>} : vector<128x128xf32>, vector<128x128xf32>, vector<128x128xf32> -> vector<128x128xf32>
    %8 = arith.addf %5, %7 : vector<128x128xf32>
    %c0_6 = arith.constant 0 : index
    %c0_7 = arith.constant 0 : index
    %9 = vector.load %arg9[%c0_6, %c0_7] : memref<128x128xf32, #tpu.memory_space<vmem>>, vector<128x128xf32>
    tpu.vector_store %arg9[%c0_6, %c0_7], %8 {strides = array<i32>} : memref<128x128xf32, #tpu.memory_space<vmem>>, vector<128x128xf32>,
    %c1_i32 = arith.constant 1 : i32
    %10 = arith.cmpi eq, %arg1, %c1_i32 : i32
    %11 = arith.extui %10 : i1 to i32
    %c0_i32_8 = arith.constant 0 : i32
    %12 = arith.cmpi ne, %11, %c0_i32_8 : i32
    scf.if %12 {
      %c0_9 = arith.constant 0 : index
      %c0_10 = arith.constant 0 : index
      %13 = vector.load %arg9[%c0_9, %c0_10] : memref<128x128xf32, #tpu.memory_space<vmem>>, vector<128x128xf32>
      %c0_11 = arith.constant 0 : index
      %c0_12 = arith.constant 0 : index
      %14 = vector.load %arg5[%c0_11, %c0_12] : memref<128x1xf32, #tpu.memory_space<vmem>>, vector<128x1xf32>
      %15 = vector.broadcast %14 : vector<128x1xf32> to vector<128x128xf32>
      %16 = arith.mulf %13, %15 : vector<128x128xf32>
      %c0_13 = arith.constant 0 : index
      %c0_14 = arith.constant 0 : index
      %17 = vector.load %arg4[%c0_13, %c0_14] : memref<128x128xf32, #tpu.memory_space<vmem>>, vector<128x128xf32>
      %cst_15 = arith.constant 1.000000e+00 : f32
      %18 = vector.broadcast %cst_15 : f32 to vector<128x128xf32>
      %19 = arith.mulf %18, %17 : vector<128x128xf32>
      %20 = arith.addf %19, %16 : vector<128x128xf32>
      %c0_16 = arith.constant 0 : index
      %c0_17 = arith.constant 0 : index
      %21 = vector.load %arg6[%c0_16, %c0_17] : memref<128x128xf32, #tpu.memory_space<vmem>>, vector<128x128xf32>
      %cst_18 = arith.constant dense<0.000000e+00> : vector<128x128xf32>
      %22 = tpu.matmul %20, %21, %cst_18 {dimension_numbers = #tpu.dot_dimension_numbers<[1], [0], [0], [1], [0, 0, 1, 1], [], []>} : vector<128x128xf32>, vector<128x128xf32>, vector<128x128xf32> -> vector<128x128xf32>
      %c0_19 = arith.constant 0 : index
      %c0_20 = arith.constant 0 : index
      %23 = vector.load %arg7[%c0_19, %c0_20] : memref<1x128xf32, #tpu.memory_space<vmem>>, vector<1x128xf32>
      %24 = vector.broadcast %23 : vector<1x128xf32> to vector<128x128xf32>
      %25 = arith.addf %22, %24 : vector<128x128xf32>
      %c0_21 = arith.constant 0 : index
      %c0_22 = arith.constant 0 : index
      %26 = vector.load %arg8[%c0_21, %c0_22] : memref<128x128xf32, #tpu.memory_space<vmem>>, vector<128x128xf32>
      tpu.vector_store %arg8[%c0_21, %c0_22], %25 {strides = array<i32>} : memref<128x128xf32, #tpu.memory_space<vmem>>, vector<128x128xf32>,
    } else {
    }
    return
  }
  func.func @transform_0(%arg0: i32, %arg1: i32) -> (i32, i32) {
    %c0_i32 = arith.constant 0 : i32
    return %arg0, %arg1 : i32, i32
  }
  func.func @transform_1(%arg0: i32, %arg1: i32) -> (i32, i32) {
    %c0_i32 = arith.constant 0 : i32
    %c0_i32_0 = arith.constant 0 : i32
    return %arg1, %c0_i32 : i32, i32
  }
  func.func @transform_2(%arg0: i32, %arg1: i32) -> (i32, i32) {
    %c0_i32 = arith.constant 0 : i32
    %c0_i32_0 = arith.constant 0 : i32
    return %arg0, %c0_i32 : i32, i32
  }
  func.func @transform_3(%arg0: i32, %arg1: i32) -> (i32, i32) {
    %c0_i32 = arith.constant 0 : i32
    %c0_i32_0 = arith.constant 0 : i32
    return %arg0, %c0_i32 : i32, i32
  }
  func.func @transform_4(%arg0: i32, %arg1: i32) -> (i32, i32) {
    %c0_i32 = arith.constant 0 : i32
    %c0_i32_0 = arith.constant 0 : i32
    %c0_i32_1 = arith.constant 0 : i32
    return %c0_i32, %c0_i32_0 : i32, i32
  }
  func.func @transform_5(%arg0: i32, %arg1: i32) -> (i32, i32) {
    %c0_i32 = arith.constant 0 : i32
    %c0_i32_0 = arith.constant 0 : i32
    %c0_i32_1 = arith.constant 0 : i32
    return %c0_i32, %c0_i32_0 : i32, i32
  }
  func.func @transform_6(%arg0: i32, %arg1: i32) -> (i32, i32) {
    %c0_i32 = arith.constant 0 : i32
    %c0_i32_0 = arith.constant 0 : i32
    return %arg0, %c0_i32 : i32, i32
  }
}

</mosaic_0001>

<llo_original>
// kernel: tpu_custom_call.1
$region0: #{tpu_custom_call.1}
  #allocation0 [shape = 'u32[]', space=smem, size = 0x4, offset = 0x4, fixed_abs, tag = 'smem constant byte address 0x4 - core index']
  #allocation1 [shape = 'u32[144,128]{1,0:T(1,128)}', space=vmem, size = 0x12000, scoped, tag = 'internal scratch']
  #allocation2 [shape = 'f32[128,128]{1,0:T(8,128)}', space=vmem, size = 0x10000, scoped, tag = 'scratch operand']
  %s0 = inlined_call_operand.vmem [shape: bf16[256,256], index: 0, kind: input, shape index: {}]
  %s1 = inlined_call_operand.hbm [shape: f32[256,128], index: 1, kind: input, shape index: {}]
  %s2 = inlined_call_operand.hbm [shape: f32[256,128], index: 2, kind: input, shape index: {}]
  %s3 = inlined_call_operand.vmem [shape: f32[256,1], index: 3, kind: input, shape index: {}]
  %s4 = inlined_call_operand.hbm [shape: f32[128,128], index: 4, kind: input, shape index: {}]
  %s5 = inlined_call_operand.vmem [shape: f32[1,128], index: 5, kind: input, shape index: {}]
  %s6 = inlined_call_operand.hbm [shape: f32[256,128], index: 6, kind: output, shape index: {}]
  %s7 = sld [smem:[#allocation0]]
  $region118: #{tpu_custom_call.1} parent=0
    _
  %s9 = ssub.s32 1, %s7
  %s10 = scalar_select 0, %s9, %s7
  $region1: #{tpu_custom_call.1} parent=0
    #allocation3 [shape = 'u8[65536]{0}', space=vmem, size = 0x10000, scoped, tag = 'input window, operand 0']
    #allocation4 [shape = 'u8[131072]{0}', space=vmem, size = 0x20000, scoped, tag = 'input window, operand 1']
    #allocation5 [shape = 's32[2]{0}', space=sflag, size = 0x8, scoped, tag = 'scoped memory for tpu_custom_call.1']
    #allocation6 [shape = 's32[2]{0}', space=sflag, size = 0x8, scoped, tag = 'scoped memory for tpu_custom_call.1']
    #allocation7 [shape = 'u8[131072]{0}', space=vmem, size = 0x20000, scoped, tag = 'input window, operand 2']
    #allocation8 [shape = 's32[2]{0}', space=sflag, size = 0x8, scoped, tag = 'scoped memory for tpu_custom_call.1']
    #allocation9 [shape = 'u8[65536]{0}', space=vmem, size = 0x10000, scoped, tag = 'input window, operand 4, single buffered']
    #allocation10 [shape = 'u8[131072]{0}', space=vmem, size = 0x20000, scoped, tag = 'output window, operand 0']
    %11 = vsyncpa [#allocation5], 0
    %s12 = scalar_lea.sflag [#allocation5], 1
    %13 = vsyncpa %s12, 0
    %14 = vsyncpa [#allocation8], 0
    %s15 = scalar_lea.sflag [#allocation8], 1
    %16 = vsyncpa %s15, 0
    %17 = vsyncpa [#allocation6], 0
    %s18 = scalar_lea.sflag [#allocation6], 1
    %19 = vsyncpa %s18, 0
    loop: start=0, step=1, limit=6
    $region2: #{tpu_custom_call.1} parent=1 // loop_pre_header
      _
    $region3: #{tpu_custom_call.1} parent=1 // loop_header
      %s21 = sphi 0, %s25
      %p22 = scmp.ge.s32.totalorder %s21, 6
      %s28 = sphi 0, %s40
      %s29 = sphi 0, %s36
      %s30 = sphi 0, %s28
      %s31 = sphi 0, %s29
      %s32 = sphi 0, %s30
      %s33 = sphi 0, %s31
      %s45 = sphi 0, %s47
      %s48 = sphi 0, %s45
      %s49 = sphi 0, %s48
      %s65 = sphi 0, %s49
      %s71 = sphi 0, %s73
      %s74 = sphi 0, %s71
      %s75 = sphi 0, %s74
      %s91 = sphi 0, %s75
      %s97 = sphi 0, %s99
      %s100 = sphi 0, %s97
      %s101 = sphi 0, %s100
      %s117 = sphi 0, %s101
      %s123 = sphi 0, %s125
      %s126 = sphi 0, %s123
      %s127 = sphi 0, %s126
      %s143 = sphi 0, %s127
      %s147 = sphi 0, %s147
      %s149 = sphi 0, %s147
      %s150 = sphi 0, %s149
      %s164 = sphi 0, %s150
      %s168 = sphi 0, %s168
      %s170 = sphi 0, %s168
      %s171 = sphi 0, %s170
      %s185 = sphi 0, %s171
      %s191 = sphi 0, %s193
      %s194 = sphi 0, %s191
      %s195 = sphi 0, %s194
      %s211 = sphi 0, %s195
    $region4: #{tpu_custom_call.1} parent=1 // loop_header_branch
      %24 = sbr.rel (%p22) target = $region8
    $region5: #{tpu_custom_call.1} parent=1 // loop_body
      %s26 = ssub.s32 %s21, 1
      %s27 = ssub.s32 %s21, 2
      %s34 = sadd.s32 1, %s29
      %p35 = scmp.ge.s32.totalorder %s34, 2
      %s36 = scalar_select %p35, 0, %s34
      %s37 = sadd.s32 1, %s28
      %s38 = scalar_select %p35, %s37, %s28
      %p39 = scmp.ge.s32.totalorder %s38, 2
      %s40 = scalar_select %p39, 0, %s38
      %s41 = ssub.s32 %s28, %s40
      %s42 = ssub.s32 %s29, %s36
      %s43 = sor.u32 %s41, %s42
      %p44 = scmp.eq.s32.totalorder %s43, 0
      %s46 = sadd.s32 %s45, 1
      %s47 = scalar_select %p44, %s45, %s46
      %p50 = pneg %p44
      %p51 = scmp.eq.s32.totalorder %s21, 3
      %p52 = por %p50, %p51
      %p53 = scmp.ne.s32.totalorder %s45, %s48
      %p54 = scmp.eq.s32.totalorder %s21, 0
      %p55 = por %p53, %p54
      %p56 = scmp.ne.s32.totalorder %s45, %s48
      %p57 = scmp.eq.s32.totalorder %s26, 3
      %p58 = por %p56, %p57
      %p59 = scmp.ne.s32.totalorder %s48, %s49
      %p60 = scmp.eq.s32.totalorder %s26, 0
      %p61 = por %p59, %p60
      %p62 = scmp.ne.s32.totalorder %s48, %s49
      %p63 = scmp.eq.s32.totalorder %s27, 3
      %p64 = por %p62, %p63
      %p66 = scmp.ne.s32.totalorder %s49, %s65
      %p67 = scmp.eq.s32.totalorder %s27, 0
      %p68 = por %p66, %p67
      %s69 = ssub.s32 %s29, %s36
      %p70 = scmp.eq.s32.totalorder %s69, 0
      %s72 = sadd.s32 %s71, 1
      %s73 = scalar_select %p70, %s71, %s72
      %p76 = pneg %p70
      %p77 = scmp.eq.s32.totalorder %s21, 3
      %p78 = por %p76, %p77
      %p79 = scmp.ne.s32.totalorder %s71, %s74
      %p80 = scmp.eq.s32.totalorder %s21, 0
      %p81 = por %p79, %p80
      %p82 = scmp.ne.s32.totalorder %s71, %s74
      %p83 = scmp.eq.s32.totalorder %s26, 3
      %p84 = por %p82, %p83
      %p85 = scmp.ne.s32.totalorder %s74, %s75
      %p86 = scmp.eq.s32.totalorder %s26, 0
      %p87 = por %p85, %p86
      %p88 = scmp.ne.s32.totalorder %s74, %s75
      %p89 = scmp.eq.s32.totalorder %s27, 3
      %p90 = por %p88, %p89
      %p92 = scmp.ne.s32.totalorder %s75, %s91
      %p93 = scmp.eq.s32.totalorder %s27, 0
      %p94 = por %p92, %p93
      %s95 = ssub.s32 %s28, %s40
      %p96 = scmp.eq.s32.totalorder %s95, 0
      %s98 = sadd.s32 %s97, 1
      %s99 = scalar_select %p96, %s97, %s98
      %p102 = pneg %p96
      %p103 = scmp.eq.s32.totalorder %s21, 3
      %p104 = por %p102, %p103
      %p105 = scmp.ne.s32.totalorder %s97, %s100
      %p106 = scmp.eq.s32.totalorder %s21, 0
      %p107 = por %p105, %p106
      %p108 = scmp.ne.s32.totalorder %s97, %s100
      %p109 = scmp.eq.s32.totalorder %s26, 3
      %p110 = por %p108, %p109
      %p111 = scmp.ne.s32.totalorder %s100, %s101
      %p112 = scmp.eq.s32.totalorder %s26, 0
      %p113 = por %p111, %p112
      %p114 = scmp.ne.s32.totalorder %s100, %s101
      %p115 = scmp.eq.s32.totalorder %s27, 3
      %p116 = por %p114, %p115
      %p118 = scmp.ne.s32.totalorder %s101, %s117
      %p119 = scmp.eq.s32.totalorder %s27, 0
      %p120 = por %p118, %p119
      %s121 = ssub.s32 %s28, %s40
      %p122 = scmp.eq.s32.totalorder %s121, 0
      %s124 = sadd.s32 %s123, 1
      %s125 = scalar_select %p122, %s123, %s124
      %p128 = pneg %p122
      %p129 = scmp.eq.s32.totalorder %s21, 3
      %p130 = por %p128, %p129
      %p131 = scmp.ne.s32.totalorder %s123, %s126
      %p132 = scmp.eq.s32.totalorder %s21, 0
      %p133 = por %p131, %p132
      %p134 = scmp.ne.s32.totalorder %s123, %s126
      %p135 = scmp.eq.s32.totalorder %s26, 3
      %p136 = por %p134, %p135
      %p137 = scmp.ne.s32.totalorder %s126, %s127
      %p138 = scmp.eq.s32.totalorder %s26, 0
      %p139 = por %p137, %p138
      %p140 = scmp.ne.s32.totalorder %s126, %s127
      %p141 = scmp.eq.s32.totalorder %s27, 3
      %p142 = por %p140, %p141
      %p144 = scmp.ne.s32.totalorder %s127, %s143
      %p145 = scmp.eq.s32.totalorder %s27, 0
      %p146 = por %p144, %p145
      %s148 = sadd.s32 %s147, 1
      %p151 = scmp.eq.s32.totalorder %s21, 3
      %p152 = scmp.ne.s32.totalorder %s147, %s149
      %p153 = scmp.eq.s32.totalorder %s21, 0
      %p154 = por %p152, %p153
      %p155 = scmp.ne.s32.totalorder %s147, %s149
      %p156 = scmp.eq.s32.totalorder %s26, 3
      %p157 = por %p155, %p156
      %p158 = scmp.ne.s32.totalorder %s149, %s150
      %p159 = scmp.eq.s32.totalorder %s26, 0
      %p160 = por %p158, %p159
      %p161 = scmp.ne.s32.totalorder %s149, %s150
      %p162 = scmp.eq.s32.totalorder %s27, 3
      %p163 = por %p161, %p162
      %p165 = scmp.ne.s32.totalorder %s150, %s164
      %p166 = scmp.eq.s32.totalorder %s27, 0
      %p167 = por %p165, %p166
      %s169 = sadd.s32 %s168, 1
      %p172 = scmp.eq.s32.totalorder %s21, 3
      %p173 = scmp.ne.s32.totalorder %s168, %s170
      %p174 = scmp.eq.s32.totalorder %s21, 0
      %p175 = por %p173, %p174
      %p176 = scmp.ne.s32.totalorder %s168, %s170
      %p177 = scmp.eq.s32.totalorder %s26, 3
      %p178 = por %p176, %p177
      %p179 = scmp.ne.s32.totalorder %s170, %s171
      %p180 = scmp.eq.s32.totalorder %s26, 0
      %p181 = por %p179, %p180
      %p182 = scmp.ne.s32.totalorder %s170, %s171
      %p183 = scmp.eq.s32.totalorder %s27, 3
      %p184 = por %p182, %p183
      %p186 = scmp.ne.s32.totalorder %s171, %s185
      %p187 = scmp.eq.s32.totalorder %s27, 0
      %p188 = por %p186, %p187
      %s189 = ssub.s32 %s28, %s40
      %p190 = scmp.eq.s32.totalorder %s189, 0
      %s192 = sadd.s32 %s191, 1
      %s193 = scalar_select %p190, %s191, %s192
      %p196 = pneg %p190
      %p197 = scmp.eq.s32.totalorder %s21, 3
      %p198 = por %p196, %p197
      %p199 = scmp.ne.s32.totalorder %s191, %s194
      %p200 = scmp.eq.s32.totalorder %s21, 0
      %p201 = por %p199, %p200
      %p202 = scmp.ne.s32.totalorder %s191, %s194
      %p203 = scmp.eq.s32.totalorder %s26, 3
      %p204 = por %p202, %p203
      %p205 = scmp.ne.s32.totalorder %s194, %s195
      %p206 = scmp.eq.s32.totalorder %s26, 0
      %p207 = por %p205, %p206
      %p208 = scmp.ne.s32.totalorder %s194, %s195
      %p209 = scmp.eq.s32.totalorder %s27, 3
      %p210 = por %p208, %p209
      %p212 = scmp.ne.s32.totalorder %s195, %s211
      %p213 = scmp.eq.s32.totalorder %s27, 0
      %p214 = por %p212, %p213
      %p215 = scmp.le.s32.totalorder 1, %s21
      %p216 = scmp.lt.s32.totalorder %s21, 5
      %p217 = pnand %p215, %p216
      %p218 = pneg %p217
      // Predicated region
      $region9: #{tpu_custom_call.1} parent=5 // pred_check
        _
      $region10: #{tpu_custom_call.1} parent=5 // pred_check_branch
        %220 = sbr.rel (%p217) target = $region12
      $region11: #{tpu_custom_call.1} parent=5 // pred_region
        %s221 = ssub.s32 %s21, 1
        // Predicated region
        $region13: #{tpu_custom_call.1} parent=11 // pred_check
          %p222 = pneg %p160
        $region14: #{tpu_custom_call.1} parent=11 // pred_check_branch
          %224 = sbr.rel (%p222) target = $region16
        $region15: #{tpu_custom_call.1} parent=11 // pred_region
          %s226 = ssub.s32 2048, 2048
          %227 = vsyncadd [#allocation8], %s226
          %s228 = sshll.u32 [#allocation9], 4
          %s229 = int_to_ptr.vmem [resolvable:$true] %s228
          %234 = dma.hbm_to_vmem [thread:$0]  %s4, 2048, %s229, [#allocation8], 128, 128, 8
        $region16: #{tpu_custom_call.1} parent=11 // pred_fallthru
          _
        // Predicated region
        $region17: #{tpu_custom_call.1} parent=11 // pred_check
          %p235 = pneg %p181
        $region18: #{tpu_custom_call.1} parent=11 // pred_check_branch
          %237 = sbr.rel (%p235) target = $region20
        $region19: #{tpu_custom_call.1} parent=11 // pred_region
          _
        $region20: #{tpu_custom_call.1} parent=11 // pred_fallthru
          _
      $region12: #{tpu_custom_call.1} parent=5 // pred_fallthru
        _
      %p238 = scmp.lt.s32.totalorder %s21, 4
      // Predicated region
      $region21: #{tpu_custom_call.1} parent=5 // pred_check
        %p239 = pneg %p238
      $region22: #{tpu_custom_call.1} parent=5 // pred_check_branch
        %241 = sbr.rel (%p239) target = $region24
      $region23: #{tpu_custom_call.1} parent=5 // pred_region
        // Predicated region
        $region25: #{tpu_custom_call.1} parent=23 // pred_check
          %p242 = pneg %p55
        $region26: #{tpu_custom_call.1} parent=23 // pred_check_branch
          %244 = sbr.rel (%p242) target = $region28
        $region27: #{tpu_custom_call.1} parent=23 // pred_region
          %s245 = sand.u32 %s45, 1
          %s246 = sand.u32 %s45, 1
          %s247 = smul.addr %s246, 64
          %s248 = scalar_lea.vmem [#allocation3], %s247
          %s249 = smul.u32 16, %s28
          %s250 = smul.addr %s249, 2
          %s251 = sadd.s32 %s29, %s250
          %s252 = smul.addr %s251, 4
          %s253 = scalar_lea.vmem %s0, %s252
          // Predicated region
          $region29: #{tpu_custom_call.1} parent=27 // pred_check
            _
          $region30: #{tpu_custom_call.1} parent=27 // pred_check_branch
            %255 = sbr.rel (0) target = $region32
          $region31: #{tpu_custom_call.1} parent=27 // pred_region
            // Predicated region
            $region33: #{tpu_custom_call.1} parent=31 // pred_check
              _
            $region34: #{tpu_custom_call.1} parent=31 // pred_check_branch
              %257 = sbr.rel target = $region36
            $region35: #{tpu_custom_call.1} parent=31 // pred_region
              // Predicated region
              $region48: #{tpu_custom_call.1} parent=35 // pred_check
                _
              $region49: #{tpu_custom_call.1} parent=35 // pred_check_branch
                %302 = sbr.rel (0) target = $region51
              $region50: #{tpu_custom_call.1} parent=35 // pred_region
                loop: start=0, step=1, limit=1
                $region52: #{tpu_custom_call.1} parent=50 // loop_pre_header
                  _
                $region53: #{tpu_custom_call.1} parent=50 // loop_header
                  %s304 = sphi 0, %s308
                  %p305 = scmp.ge.s32.totalorder %s304, 1
                  %s309 = sphi %s253, %s253
                  %s310 = sphi %s248, %s248
                $region54: #{tpu_custom_call.1} parent=50 // loop_header_branch
                  %307 = sbr.rel (%p305) target = $region58
                $region55: #{tpu_custom_call.1} parent=50 // loop_body
                  _
                $region56: #{tpu_custom_call.1} parent=50 // loop_footer
                  %s308 = sadd.s32 1, %s304
                $region57: #{tpu_custom_call.1} parent=50 // loop_footer_branch
                  %303 = sbr.rel target = $region53
                $region58: #{tpu_custom_call.1} parent=50 // loop_exit
                  _
                loop: start=0, step=1, limit=1
                $region59: #{tpu_custom_call.1} parent=50 // loop_pre_header
                  _
                $region60: #{tpu_custom_call.1} parent=50 // loop_header
                  %s313 = sphi 0, %s317
                  %p314 = scmp.ge.s32.totalorder %s313, 1
                  %s318 = sphi %s253, %s253
                  %s319 = sphi %s248, %s248
                $region61: #{tpu_custom_call.1} parent=50 // loop_header_branch
                  %316 = sbr.rel (%p314) target = $region65
                $region62: #{tpu_custom_call.1} parent=50 // loop_body
                  %v320 = vld [vmem:[%s318] sm:$0xf]
                  %321 = vst [vmem:[%s319] sm:$0xf] %v320
                  %v322 = vld [vmem:[%s318 + $0x8] sm:$0xf]
                  %323 = vst [vmem:[%s319 + $0x4] sm:$0xf] %v322
                  %v324 = vld [vmem:[%s318 + $0x10] sm:$0xf]
                  %325 = vst [vmem:[%s319 + $0x8] sm:$0xf] %v324
                  %v326 = vld [vmem:[%s318 + $0x18] sm:$0xf]
                  %327 = vst [vmem:[%s319 + $0xc] sm:$0xf] %v326
                  %v328 = vld [vmem:[%s318 + $0x20] sm:$0xf]
                  %329 = vst [vmem:[%s319 + $0x10] sm:$0xf] %v328
                  %v330 = vld [vmem:[%s318 + $0x28] sm:$0xf]
                  %331 = vst [vmem:[%s319 + $0x14] sm:$0xf] %v330
                  %v332 = vld [vmem:[%s318 + $0x30] sm:$0xf]
                  %333 = vst [vmem:[%s319 + $0x18] sm:$0xf] %v332
                  %v334 = vld [vmem:[%s318 + $0x38] sm:$0xf]
                  %335 = vst [vmem:[%s319 + $0x1c] sm:$0xf] %v334
                  %v336 = vld [vmem:[%s318 + $0x40] sm:$0xf]
                  %337 = vst [vmem:[%s319 + $0x20] sm:$0xf] %v336
                  %v338 = vld [vmem:[%s318 + $0x48] sm:$0xf]
                  %339 = vst [vmem:[%s319 + $0x24] sm:$0xf] %v338
                  %v340 = vld [vmem:[%s318 + $0x50] sm:$0xf]
                  %341 = vst [vmem:[%s319 + $0x28] sm:$0xf] %v340
                  %v342 = vld [vmem:[%s318 + $0x58] sm:$0xf]
                  %343 = vst [vmem:[%s319 + $0x2c] sm:$0xf] %v342
                  %v344 = vld [vmem:[%s318 + $0x60] sm:$0xf]
                  %345 = vst [vmem:[%s319 + $0x30] sm:$0xf] %v344
                  %v346 = vld [vmem:[%s318 + $0x68] sm:$0xf]
                  %347 = vst [vmem:[%s319 + $0x34] sm:$0xf] %v346
                  %v348 = vld [vmem:[%s318 + $0x70] sm:$0xf]
                  %349 = vst [vmem:[%s319 + $0x38] sm:$0xf] %v348
                  %v350 = vld [vmem:[%s318 + $0x78] sm:$0xf]
                  %351 = vst [vmem:[%s319 + $0x3c] sm:$0xf] %v350
                $region63: #{tpu_custom_call.1} parent=50 // loop_footer
                  %s317 = sadd.s32 1, %s313
                $region64: #{tpu_custom_call.1} parent=50 // loop_footer_branch
                  %312 = sbr.rel target = $region60
                $region65: #{tpu_custom_call.1} parent=50 // loop_exit
                  _
              $region51: #{tpu_custom_call.1} parent=35 // pred_fallthru
                _
            $region36: #{tpu_custom_call.1} parent=31 // pred_fallthru
              _
            // Predicated region
            $region37: #{tpu_custom_call.1} parent=31 // pred_check
              _
            $region38: #{tpu_custom_call.1} parent=31 // pred_check_branch
              %259 = sbr.rel (0) target = $region40
            $region39: #{tpu_custom_call.1} parent=31 // pred_region
              loop: start=0, step=1, limit=1
              $region41: #{tpu_custom_call.1} parent=39 // loop_pre_header
                _
              $region42: #{tpu_custom_call.1} parent=39 // loop_header
                %s262 = sphi 0, %s266
                %p263 = scmp.ge.s32.totalorder %s262, 1
                %s267 = sphi %s253, %s253
                %s268 = sphi %s248, %s248
              $region43: #{tpu_custom_call.1} parent=39 // loop_header_branch
                %265 = sbr.rel (%p263) target = $region47
              $region44: #{tpu_custom_call.1} parent=39 // loop_body
                %v269 = vld [vmem:[%s267] sm:$0xf]
                %270 = vst [vmem:[%s268] sm:$0xf] %v269
                %v271 = vld [vmem:[%s267 + $0x8] sm:$0xf]
                %272 = vst [vmem:[%s268 + $0x4] sm:$0xf] %v271
                %v273 = vld [vmem:[%s267 + $0x10] sm:$0xf]
                %274 = vst [vmem:[%s268 + $0x8] sm:$0xf] %v273
                %v275 = vld [vmem:[%s267 + $0x18] sm:$0xf]
                %276 = vst [vmem:[%s268 + $0xc] sm:$0xf] %v275
                %v277 = vld [vmem:[%s267 + $0x20] sm:$0xf]
                %278 = vst [vmem:[%s268 + $0x10] sm:$0xf] %v277
                %v279 = vld [vmem:[%s267 + $0x28] sm:$0xf]
                %280 = vst [vmem:[%s268 + $0x14] sm:$0xf] %v279
                %v281 = vld [vmem:[%s267 + $0x30] sm:$0xf]
                %282 = vst [vmem:[%s268 + $0x18] sm:$0xf] %v281
                %v283 = vld [vmem:[%s267 + $0x38] sm:$0xf]
                %284 = vst [vmem:[%s268 + $0x1c] sm:$0xf] %v283
                %v285 = vld [vmem:[%s267 + $0x40] sm:$0xf]
                %286 = vst [vmem:[%s268 + $0x20] sm:$0xf] %v285
                %v287 = vld [vmem:[%s267 + $0x48] sm:$0xf]
                %288 = vst [vmem:[%s268 + $0x24] sm:$0xf] %v287
                %v289 = vld [vmem:[%s267 + $0x50] sm:$0xf]
                %290 = vst [vmem:[%s268 + $0x28] sm:$0xf] %v289
                %v291 = vld [vmem:[%s267 + $0x58] sm:$0xf]
                %292 = vst [vmem:[%s268 + $0x2c] sm:$0xf] %v291
                %v293 = vld [vmem:[%s267 + $0x60] sm:$0xf]
                %294 = vst [vmem:[%s268 + $0x30] sm:$0xf] %v293
                %v295 = vld [vmem:[%s267 + $0x68] sm:$0xf]
                %296 = vst [vmem:[%s268 + $0x34] sm:$0xf] %v295
                %v297 = vld [vmem:[%s267 + $0x70] sm:$0xf]
                %298 = vst [vmem:[%s268 + $0x38] sm:$0xf] %v297
                %v299 = vld [vmem:[%s267 + $0x78] sm:$0xf]
                %300 = vst [vmem:[%s268 + $0x3c] sm:$0xf] %v299
              $region45: #{tpu_custom_call.1} parent=39 // loop_footer
                %s266 = sadd.s32 1, %s262
              $region46: #{tpu_custom_call.1} parent=39 // loop_footer_branch
                %261 = sbr.rel target = $region42
              $region47: #{tpu_custom_call.1} parent=39 // loop_exit
                _
            $region40: #{tpu_custom_call.1} parent=31 // pred_fallthru
              _
          $region32: #{tpu_custom_call.1} parent=27 // pred_fallthru
            _
          %352 = vnop
        $region28: #{tpu_custom_call.1} parent=23 // pred_fallthru
          _
        // Predicated region
        $region66: #{tpu_custom_call.1} parent=23 // pred_check
          %p353 = pneg %p81
        $region67: #{tpu_custom_call.1} parent=23 // pred_check_branch
          %355 = sbr.rel (%p353) target = $region69
        $region68: #{tpu_custom_call.1} parent=23 // pred_region
          %s356 = sand.u32 %s71, 1
          %s357 = scalar_lea.sflag [#allocation5], %s356
          %s358 = sand.u32 %s71, 1
          %s359 = smul.addr %s358, 128
          %s360 = scalar_lea.vmem [#allocation4], %s359
          %s361 = smul.u32 16, %s29
          %s363 = ssub.s32 2048, 2048
          %364 = vsyncadd %s357, %s363
          %s365 = smul.addr %s361, 128
          %s366 = scalar_lea.hbm %s1, %s365
          %s367 = sshll.u32 %s360, 4
          %s368 = int_to_ptr.vmem [resolvable:$true] %s367
          %373 = dma.hbm_to_vmem [thread:$0]  %s366, 2048, %s368, %s357, 128, 128, 8
        $region69: #{tpu_custom_call.1} parent=23 // pred_fallthru
          _
        // Predicated region
        $region70: #{tpu_custom_call.1} parent=23 // pred_check
          %p374 = pneg %p107
        $region71: #{tpu_custom_call.1} parent=23 // pred_check_branch
          %376 = sbr.rel (%p374) target = $region73
        $region72: #{tpu_custom_call.1} parent=23 // pred_region
          %s377 = sand.u32 %s21, 1
          %s378 = scalar_lea.sflag [#allocation8], %s377
          %s379 = sand.u32 %s97, 1
          %s380 = smul.addr %s379, 128
          %s381 = scalar_lea.vmem [#allocation7], %s380
          %s382 = smul.u32 16, %s28
          %s384 = ssub.s32 2048, 2048
          %385 = vsyncadd %s378, %s384
          %s386 = smul.addr %s382, 128
          %s387 = scalar_lea.hbm %s2, %s386
          %s388 = sshll.u32 %s381, 4
          %s389 = int_to_ptr.vmem [resolvable:$true] %s388
          %394 = dma.hbm_to_vmem [thread:$0]  %s387, 2048, %s389, %s378, 128, 128, 8
        $region73: #{tpu_custom_call.1} parent=23 // pred_fallthru
          _
        // Predicated region
        $region74: #{tpu_custom_call.1} parent=23 // pred_check
          %p395 = pneg %p133
        $region75: #{tpu_custom_call.1} parent=23 // pred_check_branch
          %397 = sbr.rel (%p395) target = $region77
        $region76: #{tpu_custom_call.1} parent=23 // pred_region
          %s398 = smul.u32 16, %s28
          %p399 = scmp.lt.s32.totalorder %s398, 31
          %s400 = scalar_select %p399, %s398, 31
          %s401 = smul.addr %s400, 8
          %s402 = scalar_lea.vmem %s3, %s401
          %s403 = smul.u32 16, %s28
        $region77: #{tpu_custom_call.1} parent=23 // pred_fallthru
          _
      $region24: #{tpu_custom_call.1} parent=5 // pred_fallthru
        _
      %p404 = scmp.le.s32.totalorder 1, %s21
      %p405 = scmp.lt.s32.totalorder %s21, 5
      %p406 = pnand %p404, %p405
      %p407 = pneg %p406
      // Predicated region
      $region78: #{tpu_custom_call.1} parent=5 // pred_check
        _
      $region79: #{tpu_custom_call.1} parent=5 // pred_check_branch
        %409 = sbr.rel (%p406) target = $region81
      $region80: #{tpu_custom_call.1} parent=5 // pred_region
        %s410 = ssub.s32 %s21, 1
        %s411 = sand.u32 %s48, 1
        %s412 = sand.u32 %s48, 1
        %s413 = smul.addr %s412, 64
        %s414 = scalar_lea.vmem [#allocation3], %s413
        // Predicated region
        $region82: #{tpu_custom_call.1} parent=80 // pred_check
          %p415 = pneg %p61
        $region83: #{tpu_custom_call.1} parent=80 // pred_check_branch
          %417 = sbr.rel (%p415) target = $region85
        $region84: #{tpu_custom_call.1} parent=80 // pred_region
          _
        $region85: #{tpu_custom_call.1} parent=80 // pred_fallthru
          _
        %s418 = sand.u32 %s74, 1
        %s419 = scalar_lea.sflag [#allocation5], %s418
        %s420 = sand.u32 %s74, 1
        %s421 = smul.addr %s420, 128
        %s422 = scalar_lea.vmem [#allocation4], %s421
        // Predicated region
        $region86: #{tpu_custom_call.1} parent=80 // pred_check
          %p423 = pneg %p87
        $region87: #{tpu_custom_call.1} parent=80 // pred_check_branch
          %425 = sbr.rel (%p423) target = $region89
        $region88: #{tpu_custom_call.1} parent=80 // pred_region
          %426 = dma.done %s419, 2048
        $region89: #{tpu_custom_call.1} parent=80 // pred_fallthru
          _
        %s427 = sand.u32 %s26, 1
        %s428 = scalar_lea.sflag [#allocation8], %s427
        %s429 = sand.u32 %s100, 1
        %s430 = smul.addr %s429, 128
        %s431 = scalar_lea.vmem [#allocation7], %s430
        // Predicated region
        $region90: #{tpu_custom_call.1} parent=80 // pred_check
          %p432 = pneg %p113
        $region91: #{tpu_custom_call.1} parent=80 // pred_check_branch
          %434 = sbr.rel (%p432) target = $region93
        $region92: #{tpu_custom_call.1} parent=80 // pred_region
          %435 = dma.done %s428, 2048
        $region93: #{tpu_custom_call.1} parent=80 // pred_fallthru
          _
        // Predicated region
        $region94: #{tpu_custom_call.1} parent=80 // pred_check
          %p436 = pneg %p160
        $region95: #{tpu_custom_call.1} parent=80 // pred_check_branch
          %438 = sbr.rel (%p436) target = $region97
        $region96: #{tpu_custom_call.1} parent=80 // pred_region
          %439 = dma.done [#allocation8], 2048
        $region97: #{tpu_custom_call.1} parent=80 // pred_fallthru
          _
        %s440 = sand.u32 %s48, 1
        %s441 = sand.u32 %s48, 1
        %s442 = smul.addr %s441, 64
        %s443 = scalar_lea.vmem [#allocation3], %s442
        %p444 = pneg %p61
        %p445 = pneg %p58
        %s446 = sand.u32 %s74, 1
        %s447 = scalar_lea.sflag [#allocation5], %s446
        %s448 = sand.u32 %s74, 1
        %s449 = smul.addr %s448, 128
        %s450 = scalar_lea.vmem [#allocation4], %s449
        %p451 = pneg %p87
        %p452 = pneg %p84
        %s453 = sand.u32 %s26, 1
        %s454 = scalar_lea.sflag [#allocation8], %s453
        %s455 = sand.u32 %s100, 1
        %s456 = smul.addr %s455, 128
        %s457 = scalar_lea.vmem [#allocation7], %s456
        %p458 = pneg %p113
        %p459 = pneg %p110
        %s460 = smul.u32 16, %s30
        %p461 = scmp.lt.s32.totalorder %s460, 31
        %s462 = scalar_select %p461, %s460, 31
        %s463 = smul.addr %s462, 8
        %s464 = scalar_lea.vmem %s3, %s463
        %p465 = pneg %p139
        %p466 = pneg %p136
        %p467 = pneg %p160
        %p468 = pneg %p157
        %p469 = pneg %p181
        %p470 = pneg %p178
        %p471 = pneg %p207
        %p472 = pneg %p204
        %s473 = sand.u32 %s194, 1
        %s474 = scalar_lea.sflag [#allocation6], %s473
        %s475 = sand.u32 %s194, 1
        %s476 = smul.addr %s475, 128
        %s477 = scalar_lea.vmem [#allocation10], %s476
        %s478 = smul.u32 16, %s30
        %s479 = smul.u32 16, %s31
        %s480 = smul.u32 16, %s30
        %s481 = smul.u32 16, %s30
        %p482 = scmp.lt.s32.totalorder %s481, 31
        %s483 = scalar_select %p482, %s481, 31
        %s484 = smul.addr %s483, 8
        %s485 = scalar_lea.vmem %s3, %s484
        %s486 = smul.u32 16, %s30
        %s487 = smul.u32 16, %s30
        %p488 = scmp.eq.s32.totalorder %s31, 0
        // Predicated region
        $region98: #{tpu_custom_call.1} parent=80 // pred_check
          %p489 = pneg %p488
        $region99: #{tpu_custom_call.1} parent=80 // pred_check_branch
          %491 = sbr.rel (%p489) target = $region101
        $region100: #{tpu_custom_call.1} parent=80 // pred_region
          %492 = vst [vmem:[#allocation2] sm:$0xff] 0.0
          %493 = vst [vmem:[#allocation2 + $0x8] sm:$0xff] 0.0
          %494 = vst [vmem:[#allocation2 + $0x10] sm:$0xff] 0.0
          %495 = vst [vmem:[#allocation2 + $0x18] sm:$0xff] 0.0
          %496 = vst [vmem:[#allocation2 + $0x20] sm:$0xff] 0.0
          %497 = vst [vmem:[#allocation2 + $0x28] sm:$0xff] 0.0
          %498 = vst [vmem:[#allocation2 + $0x30] sm:$0xff] 0.0
          %499 = vst [vmem:[#allocation2 + $0x38] sm:$0xff] 0.0
          %500 = vst [vmem:[#allocation2 + $0x40] sm:$0xff] 0.0
          %501 = vst [vmem:[#allocation2 + $0x48] sm:$0xff] 0.0
          %502 = vst [vmem:[#allocation2 + $0x50] sm:$0xff] 0.0
          %503 = vst [vmem:[#allocation2 + $0x58] sm:$0xff] 0.0
          %504 = vst [vmem:[#allocation2 + $0x60] sm:$0xff] 0.0
          %505 = vst [vmem:[#allocation2 + $0x68] sm:$0xff] 0.0
          %506 = vst [vmem:[#allocation2 + $0x70] sm:$0xff] 0.0
          %507 = vst [vmem:[#allocation2 + $0x78] sm:$0xff] 0.0
        $region101: #{tpu_custom_call.1} parent=80 // pred_fallthru
          _
        %v508 = vld [vmem:[%s414] sm:$0xf]
        %v509 = vld [vmem:[%s414 + $0x4] sm:$0xf]
        %v510 = vld [vmem:[%s414 + $0x8] sm:$0xf]
        %v511 = vld [vmem:[%s414 + $0xc] sm:$0xf]
        %v512 = vld [vmem:[%s414 + $0x10] sm:$0xf]
        %v513 = vld [vmem:[%s414 + $0x14] sm:$0xf]
        %v514 = vld [vmem:[%s414 + $0x18] sm:$0xf]
        %v515 = vld [vmem:[%s414 + $0x1c] sm:$0xf]
        %v516 = vld [vmem:[%s414 + $0x20] sm:$0xf]
        %v517 = vld [vmem:[%s414 + $0x24] sm:$0xf]
        %v518 = vld [vmem:[%s414 + $0x28] sm:$0xf]
        %v519 = vld [vmem:[%s414 + $0x2c] sm:$0xf]
        %v520 = vld [vmem:[%s414 + $0x30] sm:$0xf]
        %v521 = vld [vmem:[%s414 + $0x34] sm:$0xf]
        %v522 = vld [vmem:[%s414 + $0x38] sm:$0xf]
        %v523 = vld [vmem:[%s414 + $0x3c] sm:$0xf]
        %v524 = vunpack.c.l.bf16 %v508
        %v525 = vunpack.c.l.bf16 %v509
        %v526 = vunpack.c.l.bf16 %v510
        %v527 = vunpack.c.l.bf16 %v511
        %v528 = vunpack.c.l.bf16 %v512
        %v529 = vunpack.c.l.bf16 %v513
        %v530 = vunpack.c.l.bf16 %v514
        %v531 = vunpack.c.l.bf16 %v515
        %v532 = vunpack.c.l.bf16 %v516
        %v533 = vunpack.c.l.bf16 %v517
        %v534 = vunpack.c.l.bf16 %v518
        %v535 = vunpack.c.l.bf16 %v519
        %v536 = vunpack.c.l.bf16 %v520
        %v537 = vunpack.c.l.bf16 %v521
        %v538 = vunpack.c.l.bf16 %v522
        %v539 = vunpack.c.l.bf16 %v523
        %v540 = vld [vmem:[#allocation2] sm:$0xff]
        %v541 = vld [vmem:[#allocation2 + $0x8] sm:$0xff]
        %v542 = vld [vmem:[#allocation2 + $0x10] sm:$0xff]
        %v543 = vld [vmem:[#allocation2 + $0x18] sm:$0xff]
        %v544 = vld [vmem:[#allocation2 + $0x20] sm:$0xff]
        %v545 = vld [vmem:[#allocation2 + $0x28] sm:$0xff]
        %v546 = vld [vmem:[#allocation2 + $0x30] sm:$0xff]
        %v547 = vld [vmem:[#allocation2 + $0x38] sm:$0xff]
        %v548 = vld [vmem:[#allocation2 + $0x40] sm:$0xff]
        %v549 = vld [vmem:[#allocation2 + $0x48] sm:$0xff]
        %v550 = vld [vmem:[#allocation2 + $0x50] sm:$0xff]
        %v551 = vld [vmem:[#allocation2 + $0x58] sm:$0xff]
        %v552 = vld [vmem:[#allocation2 + $0x60] sm:$0xff]
        %v553 = vld [vmem:[#allocation2 + $0x68] sm:$0xff]
        %v554 = vld [vmem:[#allocation2 + $0x70] sm:$0xff]
        %v555 = vld [vmem:[#allocation2 + $0x78] sm:$0xff]
        %v556 = vld [vmem:[%s422] sm:$0xff]
        %v557 = vld [vmem:[%s422 + $0x8] sm:$0xff]
        %v558 = vld [vmem:[%s422 + $0x10] sm:$0xff]
        %v559 = vld [vmem:[%s422 + $0x18] sm:$0xff]
        %v560 = vld [vmem:[%s422 + $0x20] sm:$0xff]
        %v561 = vld [vmem:[%s422 + $0x28] sm:$0xff]
        %v562 = vld [vmem:[%s422 + $0x30] sm:$0xff]
        %v563 = vld [vmem:[%s422 + $0x38] sm:$0xff]
        %v564 = vld [vmem:[%s422 + $0x40] sm:$0xff]
        %v565 = vld [vmem:[%s422 + $0x48] sm:$0xff]
        %v566 = vld [vmem:[%s422 + $0x50] sm:$0xff]
        %v567 = vld [vmem:[%s422 + $0x58] sm:$0xff]
        %v568 = vld [vmem:[%s422 + $0x60] sm:$0xff]
        %v569 = vld [vmem:[%s422 + $0x68] sm:$0xff]
        %v570 = vld [vmem:[%s422 + $0x70] sm:$0xff]
        %v571 = vld [vmem:[%s422 + $0x78] sm:$0xff]
        %572 = vmatprep.subr.mxu0 0.0
        %573 = vmatpush1.msra.mxu0 %v556
        %574 = vmatprep.subr.mxu0 0.0
        %575 = vmatpush1.msra.mxu0 %v557
        %576 = vmatprep.subr.mxu0 0.0
        %577 = vmatpush1.msra.mxu0 %v558
        %578 = vmatprep.subr.mxu0 0.0
        %579 = vmatpush1.msra.mxu0 %v559
        %580 = vmatprep.subr.mxu0 0.0
        %581 = vmatpush1.msra.mxu0 %v560
        %582 = vmatprep.subr.mxu0 0.0
        %583 = vmatpush1.msra.mxu0 %v561
        %584 = vmatprep.subr.mxu0 0.0
        %585 = vmatpush1.msra.mxu0 %v562
        %586 = vmatprep.subr.mxu0 0.0
        %587 = vmatpush1.msra.mxu0 %v563
        %588 = vmatprep.subr.mxu0 0.0
        %589 = vmatpush1.msra.mxu0 %v564
        %590 = vmatprep.subr.mxu0 0.0
        %591 = vmatpush1.msra.mxu0 %v565
        %592 = vmatprep.subr.mxu0 0.0
        %593 = vmatpush1.msra.mxu0 %v566
        %594 = vmatprep.subr.mxu0 0.0
        %595 = vmatpush1.msra.mxu0 %v567
        %596 = vmatprep.subr.mxu0 0.0
        %597 = vmatpush1.msra.mxu0 %v568
        %598 = vmatprep.subr.mxu0 0.0
        %599 = vmatpush1.msra.mxu0 %v569
        %600 = vmatprep.subr.mxu0 0.0
        %601 = vmatpush1.msra.mxu0 %v570
        %602 = vmatprep.subr.mxu0 0.0
        %603 = vmatpush1.msra.mxu0 %v571
        %604 = vmatprep.subr.mxu0 0.0
        %605 = vmatpush1.msra.mxu0 0.0
        %606 = vmatprep.subr.mxu0 0.0
        %607 = vmatpush1.msra.mxu0 0.0
        %608 = vmatprep.subr.mxu0 0.0
        %609 = vmatpush1.msra.mxu0 0.0
        %610 = vmatprep.subr.mxu0 0.0
        %611 = vmatpush1.msra.mxu0 0.0
        %612 = vmatprep.subr.mxu0 0.0
        %613 = vmatpush1.msra.mxu0 0.0
        %614 = vmatprep.subr.mxu0 0.0
        %615 = vmatpush1.msra.mxu0 0.0
        %616 = vmatprep.subr.mxu0 0.0
        %617 = vmatpush1.msra.mxu0 0.0
        %618 = vmatprep.subr.mxu0 0.0
        %619 = vmatpush1.msra.mxu0 0.0
        %620 = vmatprep.subr.mxu0 0.0
        %621 = vmatpush1.msra.mxu0 0.0
        %622 = vmatprep.subr.mxu0 0.0
        %623 = vmatpush1.msra.mxu0 0.0
        %624 = vmatprep.subr.mxu0 0.0
        %625 = vmatpush1.msra.mxu0 0.0
        %626 = vmatprep.subr.mxu0 0.0
        %627 = vmatpush1.msra.mxu0 0.0
        %628 = vmatprep.subr.mxu0 0.0
        %629 = vmatpush1.msra.mxu0 0.0
        %630 = vmatprep.subr.mxu0 0.0
        %631 = vmatpush1.msra.mxu0 0.0
        %632 = vmatprep.subr.mxu0 0.0
        %633 = vmatpush1.msra.mxu0 0.0
        %634 = vmatprep.subr.mxu0 0.0
        %635 = vmatpush1.msra.mxu0 0.0
        %636 = vmatprep.mubr.f32.mxu0 0.0
        %637 = vmatmul.mubr.f32.gmra.mrb[0].mxu0 %v524
        %v638 = vpop.f32.mrb[0].mxu0
        %v639 = vadd.f32 0.0, %v638
        %v640 = vpop.f32.mrb[0].mxu0
        %641 = vmatprep.mubr.f32.mxu0 0.0
        %642 = vmatmul.mubr.f32.gmra.mrb[0].mxu0 %v525
        %v643 = vpop.f32.mrb[0].mxu0
        %v644 = vadd.f32 0.0, %v643
        %v645 = vpop.f32.mrb[0].mxu0
        %646 = vmatprep.mubr.f32.mxu0 0.0
        %647 = vmatmul.mubr.f32.gmra.mrb[0].mxu0 %v526
        %v648 = vpop.f32.mrb[0].mxu0
        %v649 = vadd.f32 0.0, %v648
        %v650 = vpop.f32.mrb[0].mxu0
        %651 = vmatprep.mubr.f32.mxu0 0.0
        %652 = vmatmul.mubr.f32.gmra.mrb[0].mxu0 %v527
        %v653 = vpop.f32.mrb[0].mxu0
        %v654 = vadd.f32 0.0, %v653
        %v655 = vpop.f32.mrb[0].mxu0
        %656 = vmatprep.mubr.f32.mxu0 0.0
        %657 = vmatmul.mubr.f32.gmra.mrb[0].mxu0 %v528
        %v658 = vpop.f32.mrb[0].mxu0
        %v659 = vadd.f32 0.0, %v658
        %v660 = vpop.f32.mrb[0].mxu0
        %661 = vmatprep.mubr.f32.mxu0 0.0
        %662 = vmatmul.mubr.f32.gmra.mrb[0].mxu0 %v529
        %v663 = vpop.f32.mrb[0].mxu0
        %v664 = vadd.f32 0.0, %v663
        %v665 = vpop.f32.mrb[0].mxu0
        %666 = vmatprep.mubr.f32.mxu0 0.0
        %667 = vmatmul.mubr.f32.gmra.mrb[0].mxu0 %v530
        %v668 = vpop.f32.mrb[0].mxu0
        %v669 = vadd.f32 0.0, %v668
        %v670 = vpop.f32.mrb[0].mxu0
        %671 = vmatprep.mubr.f32.mxu0 0.0
        %672 = vmatmul.mubr.f32.gmra.mrb[0].mxu0 %v531
        %v673 = vpop.f32.mrb[0].mxu0
        %v674 = vadd.f32 0.0, %v673
        %v675 = vpop.f32.mrb[0].mxu0
        %676 = vmatprep.mubr.f32.mxu0 0.0
        %677 = vmatmul.mubr.f32.gmra.mrb[0].mxu0 %v532
        %v678 = vpop.f32.mrb[0].mxu0
        %v679 = vadd.f32 0.0, %v678
        %v680 = vpop.f32.mrb[0].mxu0
        %681 = vmatprep.mubr.f32.mxu0 0.0
        %682 = vmatmul.mubr.f32.gmra.mrb[0].mxu0 %v533
        %v683 = vpop.f32.mrb[0].mxu0
        %v684 = vadd.f32 0.0, %v683
        %v685 = vpop.f32.mrb[0].mxu0
        %686 = vmatprep.mubr.f32.mxu0 0.0
        %687 = vmatmul.mubr.f32.gmra.mrb[0].mxu0 %v534
        %v688 = vpop.f32.mrb[0].mxu0
        %v689 = vadd.f32 0.0, %v688
        %v690 = vpop.f32.mrb[0].mxu0
        %691 = vmatprep.mubr.f32.mxu0 0.0
        %692 = vmatmul.mubr.f32.gmra.mrb[0].mxu0 %v535
        %v693 = vpop.f32.mrb[0].mxu0
        %v694 = vadd.f32 0.0, %v693
        %v695 = vpop.f32.mrb[0].mxu0
        %696 = vmatprep.mubr.f32.mxu0 0.0
        %697 = vmatmul.mubr.f32.gmra.mrb[0].mxu0 %v536
        %v698 = vpop.f32.mrb[0].mxu0
        %v699 = vadd.f32 0.0, %v698
        %v700 = vpop.f32.mrb[0].mxu0
        %701 = vmatprep.mubr.f32.mxu0 0.0
        %702 = vmatmul.mubr.f32.gmra.mrb[0].mxu0 %v537
        %v703 = vpop.f32.mrb[0].mxu0
        %v704 = vadd.f32 0.0, %v703
        %v705 = vpop.f32.mrb[0].mxu0
        %706 = vmatprep.mubr.f32.mxu0 0.0
        %707 = vmatmul.mubr.f32.gmra.mrb[0].mxu0 %v538
        %v708 = vpop.f32.mrb[0].mxu0
        %v709 = vadd.f32 0.0, %v708
        %v710 = vpop.f32.mrb[0].mxu0
        %711 = vmatprep.mubr.f32.mxu0 0.0
        %712 = vmatmul.mubr.f32.gmra.mrb[0].mxu0 %v539
        %v713 = vpop.f32.mrb[0].mxu0
        %v714 = vadd.f32 0.0, %v713
        %v715 = vpop.f32.mrb[0].mxu0
        %716 = vdwg.mxu0
        %v717 = vadd.f32 %v540, %v639
        %v718 = vadd.f32 %v541, %v644
        %v719 = vadd.f32 %v542, %v649
        %v720 = vadd.f32 %v543, %v654
        %v721 = vadd.f32 %v544, %v659
        %v722 = vadd.f32 %v545, %v664
        %v723 = vadd.f32 %v546, %v669
        %v724 = vadd.f32 %v547, %v674
        %v725 = vadd.f32 %v548, %v679
        %v726 = vadd.f32 %v549, %v684
        %v727 = vadd.f32 %v550, %v689
        %v728 = vadd.f32 %v551, %v694
        %v729 = vadd.f32 %v552, %v699
        %v730 = vadd.f32 %v553, %v704
        %v731 = vadd.f32 %v554, %v709
        %v732 = vadd.f32 %v555, %v714
        %733 = vst [vmem:[#allocation2] sm:$0xff] %v717
        %734 = vst [vmem:[#allocation2 + $0x8] sm:$0xff] %v718
        %735 = vst [vmem:[#allocation2 + $0x10] sm:$0xff] %v719
        %736 = vst [vmem:[#allocation2 + $0x18] sm:$0xff] %v720
        %737 = vst [vmem:[#allocation2 + $0x20] sm:$0xff] %v721
        %738 = vst [vmem:[#allocation2 + $0x28] sm:$0xff] %v722
        %739 = vst [vmem:[#allocation2 + $0x30] sm:$0xff] %v723
        %740 = vst [vmem:[#allocation2 + $0x38] sm:$0xff] %v724
        %741 = vst [vmem:[#allocation2 + $0x40] sm:$0xff] %v725
        %742 = vst [vmem:[#allocation2 + $0x48] sm:$0xff] %v726
        %743 = vst [vmem:[#allocation2 + $0x50] sm:$0xff] %v727
        %744 = vst [vmem:[#allocation2 + $0x58] sm:$0xff] %v728
        %745 = vst [vmem:[#allocation2 + $0x60] sm:$0xff] %v729
        %746 = vst [vmem:[#allocation2 + $0x68] sm:$0xff] %v730
        %747 = vst [vmem:[#allocation2 + $0x70] sm:$0xff] %v731
        %748 = vst [vmem:[#allocation2 + $0x78] sm:$0xff] %v732
        %p749 = scmp.eq.s32.totalorder %s31, 1
        // Predicated region
        $region102: #{tpu_custom_call.1} parent=80 // pred_check
          %p750 = pneg %p749
        $region103: #{tpu_custom_call.1} parent=80 // pred_check_branch
          %752 = sbr.rel (%p750) target = $region105
        $region104: #{tpu_custom_call.1} parent=80 // pred_region
          %v753 = vld [vmem:[#allocation2] sm:$0xff]
          %v754 = vld [vmem:[#allocation2 + $0x8] sm:$0xff]
          %v755 = vld [vmem:[#allocation2 + $0x10] sm:$0xff]
          %v756 = vld [vmem:[#allocation2 + $0x18] sm:$0xff]
          %v757 = vld [vmem:[#allocation2 + $0x20] sm:$0xff]
          %v758 = vld [vmem:[#allocation2 + $0x28] sm:$0xff]
          %v759 = vld [vmem:[#allocation2 + $0x30] sm:$0xff]
          %v760 = vld [vmem:[#allocation2 + $0x38] sm:$0xff]
          %v761 = vld [vmem:[#allocation2 + $0x40] sm:$0xff]
          %v762 = vld [vmem:[#allocation2 + $0x48] sm:$0xff]
          %v763 = vld [vmem:[#allocation2 + $0x50] sm:$0xff]
          %v764 = vld [vmem:[#allocation2 + $0x58] sm:$0xff]
          %v765 = vld [vmem:[#allocation2 + $0x60] sm:$0xff]
          %v766 = vld [vmem:[#allocation2 + $0x68] sm:$0xff]
          %v767 = vld [vmem:[#allocation2 + $0x70] sm:$0xff]
          %v768 = vld [vmem:[#allocation2 + $0x78] sm:$0xff]
          %v769 = vld [vmem:[%s485] sm:$0xff]
          %v770 = vld [vmem:[%s485 + $0x8] sm:$0xff]
          %v771 = vld [vmem:[%s485 + $0x10] sm:$0xff]
          %v772 = vld [vmem:[%s485 + $0x18] sm:$0xff]
          %v773 = vld [vmem:[%s485 + $0x20] sm:$0xff]
          %v774 = vld [vmem:[%s485 + $0x28] sm:$0xff]
          %v775 = vld [vmem:[%s485 + $0x30] sm:$0xff]
          %v776 = vld [vmem:[%s485 + $0x38] sm:$0xff]
          %v777 = vld [vmem:[%s485 + $0x40] sm:$0xff]
          %v778 = vld [vmem:[%s485 + $0x48] sm:$0xff]
          %v779 = vld [vmem:[%s485 + $0x50] sm:$0xff]
          %v780 = vld [vmem:[%s485 + $0x58] sm:$0xff]
          %v781 = vld [vmem:[%s485 + $0x60] sm:$0xff]
          %v782 = vld [vmem:[%s485 + $0x68] sm:$0xff]
          %v783 = vld [vmem:[%s485 + $0x70] sm:$0xff]
          %v784 = vld [vmem:[%s485 + $0x78] sm:$0xff]
          %786 = vset.pattern.permute.xlu0 0
          %787 = vperm.xlu0 %786, %v769
          %v788 = vpop.permute.xlu0 %787
          %791 = vset.pattern.permute.xlu0 0
          %792 = vperm.xlu0 %791, %v770
          %v793 = vpop.permute.xlu0 %792
          %796 = vset.pattern.permute.xlu0 0
          %797 = vperm.xlu0 %796, %v771
          %v798 = vpop.permute.xlu0 %797
          %801 = vset.pattern.permute.xlu0 0
          %802 = vperm.xlu0 %801, %v772
          %v803 = vpop.permute.xlu0 %802
          %806 = vset.pattern.permute.xlu0 0
          %807 = vperm.xlu0 %806, %v773
          %v808 = vpop.permute.xlu0 %807
          %811 = vset.pattern.permute.xlu0 0
          %812 = vperm.xlu0 %811, %v774
          %v813 = vpop.permute.xlu0 %812
          %816 = vset.pattern.permute.xlu0 0
          %817 = vperm.xlu0 %816, %v775
          %v818 = vpop.permute.xlu0 %817
          %821 = vset.pattern.permute.xlu0 0
          %822 = vperm.xlu0 %821, %v776
          %v823 = vpop.permute.xlu0 %822
          %826 = vset.pattern.permute.xlu0 0
          %827 = vperm.xlu0 %826, %v777
          %v828 = vpop.permute.xlu0 %827
          %831 = vset.pattern.permute.xlu0 0
          %832 = vperm.xlu0 %831, %v778
          %v833 = vpop.permute.xlu0 %832
          %836 = vset.pattern.permute.xlu0 0
          %837 = vperm.xlu0 %836, %v779
          %v838 = vpop.permute.xlu0 %837
          %841 = vset.pattern.permute.xlu0 0
          %842 = vperm.xlu0 %841, %v780
          %v843 = vpop.permute.xlu0 %842
          %846 = vset.pattern.permute.xlu0 0
          %847 = vperm.xlu0 %846, %v781
          %v848 = vpop.permute.xlu0 %847
          %851 = vset.pattern.permute.xlu0 0
          %852 = vperm.xlu0 %851, %v782
          %v853 = vpop.permute.xlu0 %852
          %856 = vset.pattern.permute.xlu0 0
          %857 = vperm.xlu0 %856, %v783
          %v858 = vpop.permute.xlu0 %857
          %861 = vset.pattern.permute.xlu0 0
          %862 = vperm.xlu0 %861, %v784
          %v863 = vpop.permute.xlu0 %862
          %v865 = vmul.f32 %v753, %v788
          %v866 = vmul.f32 %v754, %v793
          %v867 = vmul.f32 %v755, %v798
          %v868 = vmul.f32 %v756, %v803
          %v869 = vmul.f32 %v757, %v808
          %v870 = vmul.f32 %v758, %v813
          %v871 = vmul.f32 %v759, %v818
          %v872 = vmul.f32 %v760, %v823
          %v873 = vmul.f32 %v761, %v828
          %v874 = vmul.f32 %v762, %v833
          %v875 = vmul.f32 %v763, %v838
          %v876 = vmul.f32 %v764, %v843
          %v877 = vmul.f32 %v765, %v848
          %v878 = vmul.f32 %v766, %v853
          %v879 = vmul.f32 %v767, %v858
          %v880 = vmul.f32 %v768, %v863
          %v881 = vld [vmem:[%s431] sm:$0xff]
          %v882 = vld [vmem:[%s431 + $0x8] sm:$0xff]
          %v883 = vld [vmem:[%s431 + $0x10] sm:$0xff]
          %v884 = vld [vmem:[%s431 + $0x18] sm:$0xff]
          %v885 = vld [vmem:[%s431 + $0x20] sm:$0xff]
          %v886 = vld [vmem:[%s431 + $0x28] sm:$0xff]
          %v887 = vld [vmem:[%s431 + $0x30] sm:$0xff]
          %v888 = vld [vmem:[%s431 + $0x38] sm:$0xff]
          %v889 = vld [vmem:[%s431 + $0x40] sm:$0xff]
          %v890 = vld [vmem:[%s431 + $0x48] sm:$0xff]
          %v891 = vld [vmem:[%s431 + $0x50] sm:$0xff]
          %v892 = vld [vmem:[%s431 + $0x58] sm:$0xff]
          %v893 = vld [vmem:[%s431 + $0x60] sm:$0xff]
          %v894 = vld [vmem:[%s431 + $0x68] sm:$0xff]
          %v895 = vld [vmem:[%s431 + $0x70] sm:$0xff]
          %v896 = vld [vmem:[%s431 + $0x78] sm:$0xff]
          %v897 = vadd.f32 %v881, %v865
          %v898 = vadd.f32 %v882, %v866
          %v899 = vadd.f32 %v883, %v867
          %v900 = vadd.f32 %v884, %v868
          %v901 = vadd.f32 %v885, %v869
          %v902 = vadd.f32 %v886, %v870
          %v903 = vadd.f32 %v887, %v871
          %v904 = vadd.f32 %v888, %v872
          %v905 = vadd.f32 %v889, %v873
          %v906 = vadd.f32 %v890, %v874
          %v907 = vadd.f32 %v891, %v875
          %v908 = vadd.f32 %v892, %v876
          %v909 = vadd.f32 %v893, %v877
          %v910 = vadd.f32 %v894, %v878
          %v911 = vadd.f32 %v895, %v879
          %v912 = vadd.f32 %v896, %v880
          %v913 = vld [vmem:[#allocation9] sm:$0xff]
          %v914 = vld [vmem:[#allocation9 + $0x8] sm:$0xff]
          %v915 = vld [vmem:[#allocation9 + $0x10] sm:$0xff]
          %v916 = vld [vmem:[#allocation9 + $0x18] sm:$0xff]
          %v917 = vld [vmem:[#allocation9 + $0x20] sm:$0xff]
          %v918 = vld [vmem:[#allocation9 + $0x28] sm:$0xff]
          %v919 = vld [vmem:[#allocation9 + $0x30] sm:$0xff]
          %v920 = vld [vmem:[#allocation9 + $0x38] sm:$0xff]
          %v921 = vld [vmem:[#allocation9 + $0x40] sm:$0xff]
          %v922 = vld [vmem:[#allocation9 + $0x48] sm:$0xff]
          %v923 = vld [vmem:[#allocation9 + $0x50] sm:$0xff]
          %v924 = vld [vmem:[#allocation9 + $0x58] sm:$0xff]
          %v925 = vld [vmem:[#allocation9 + $0x60] sm:$0xff]
          %v926 = vld [vmem:[#allocation9 + $0x68] sm:$0xff]
          %v927 = vld [vmem:[#allocation9 + $0x70] sm:$0xff]
          %v928 = vld [vmem:[#allocation9 + $0x78] sm:$0xff]
          %v929 = vld [vmem:[%s5] sm:$0x1]
          %v931 = vlaneseq
          %v932 = vshrl.u32 %v931, 7
          %v933 = vsub.s32 0, %v932
          %v934 = vrot.slane %v929, %v933
          %936 = vmatprep.subr.mxu0 0.0
          %937 = vmatpush1.msra.mxu0 %v913
          %938 = vmatprep.subr.mxu0 0.0
          %939 = vmatpush1.msra.mxu0 %v914
          %940 = vmatprep.subr.mxu0 0.0
          %941 = vmatpush1.msra.mxu0 %v915
          %942 = vmatprep.subr.mxu0 0.0
          %943 = vmatpush1.msra.mxu0 %v916
          %944 = vmatprep.subr.mxu0 0.0
          %945 = vmatpush1.msra.mxu0 %v917
          %946 = vmatprep.subr.mxu0 0.0
          %947 = vmatpush1.msra.mxu0 %v918
          %948 = vmatprep.subr.mxu0 0.0
          %949 = vmatpush1.msra.mxu0 %v919
          %950 = vmatprep.subr.mxu0 0.0
          %951 = vmatpush1.msra.mxu0 %v920
          %952 = vmatprep.subr.mxu0 0.0
          %953 = vmatpush1.msra.mxu0 %v921
          %954 = vmatprep.subr.mxu0 0.0
          %955 = vmatpush1.msra.mxu0 %v922
          %956 = vmatprep.subr.mxu0 0.0
          %957 = vmatpush1.msra.mxu0 %v923
          %958 = vmatprep.subr.mxu0 0.0
          %959 = vmatpush1.msra.mxu0 %v924
          %960 = vmatprep.subr.mxu0 0.0
          %961 = vmatpush1.msra.mxu0 %v925
          %962 = vmatprep.subr.mxu0 0.0
          %963 = vmatpush1.msra.mxu0 %v926
          %964 = vmatprep.subr.mxu0 0.0
          %965 = vmatpush1.msra.mxu0 %v927
          %966 = vmatprep.subr.mxu0 0.0
          %967 = vmatpush1.msra.mxu0 %v928
          %968 = vmatprep.subr.mxu0 0.0
          %969 = vmatpush1.msra.mxu0 0.0
          %970 = vmatprep.subr.mxu0 0.0
          %971 = vmatpush1.msra.mxu0 0.0
          %972 = vmatprep.subr.mxu0 0.0
          %973 = vmatpush1.msra.mxu0 0.0
          %974 = vmatprep.subr.mxu0 0.0
          %975 = vmatpush1.msra.mxu0 0.0
          %976 = vmatprep.subr.mxu0 0.0
          %977 = vmatpush1.msra.mxu0 0.0
          %978 = vmatprep.subr.mxu0 0.0
          %979 = vmatpush1.msra.mxu0 0.0
          %980 = vmatprep.subr.mxu0 0.0
          %981 = vmatpush1.msra.mxu0 0.0
          %982 = vmatprep.subr.mxu0 0.0
          %983 = vmatpush1.msra.mxu0 0.0
          %984 = vmatprep.subr.mxu0 0.0
          %985 = vmatpush1.msra.mxu0 0.0
          %986 = vmatprep.subr.mxu0 0.0
          %987 = vmatpush1.msra.mxu0 0.0
          %988 = vmatprep.subr.mxu0 0.0
          %989 = vmatpush1.msra.mxu0 0.0
          %990 = vmatprep.subr.mxu0 0.0
          %991 = vmatpush1.msra.mxu0 0.0
          %992 = vmatprep.subr.mxu0 0.0
          %993 = vmatpush1.msra.mxu0 0.0
          %994 = vmatprep.subr.mxu0 0.0
          %995 = vmatpush1.msra.mxu0 0.0
          %996 = vmatprep.subr.mxu0 0.0
          %997 = vmatpush1.msra.mxu0 0.0
          %998 = vmatprep.subr.mxu0 0.0
          %999 = vmatpush1.msra.mxu0 0.0
          %1000 = vmatprep.mubr.f32.mxu0 0.0
          %1001 = vmatmul.mubr.f32.gmra.mrb[0].mxu0 %v897
          %v1002 = vpop.f32.mrb[0].mxu0
          %v1003 = vadd.f32 %v934, %v1002
          %v1004 = vpop.f32.mrb[0].mxu0
          %1005 = vmatprep.mubr.f32.mxu0 0.0
          %1006 = vmatmul.mubr.f32.gmra.mrb[0].mxu0 %v898
          %v1007 = vpop.f32.mrb[0].mxu0
          %v1008 = vadd.f32 %v934, %v1007
          %v1009 = vpop.f32.mrb[0].mxu0
          %1010 = vmatprep.mubr.f32.mxu0 0.0
          %1011 = vmatmul.mubr.f32.gmra.mrb[0].mxu0 %v899
          %v1012 = vpop.f32.mrb[0].mxu0
          %v1013 = vadd.f32 %v934, %v1012
          %v1014 = vpop.f32.mrb[0].mxu0
          %1015 = vmatprep.mubr.f32.mxu0 0.0
          %1016 = vmatmul.mubr.f32.gmra.mrb[0].mxu0 %v900
          %v1017 = vpop.f32.mrb[0].mxu0
          %v1018 = vadd.f32 %v934, %v1017
          %v1019 = vpop.f32.mrb[0].mxu0
          %1020 = vmatprep.mubr.f32.mxu0 0.0
          %1021 = vmatmul.mubr.f32.gmra.mrb[0].mxu0 %v901
          %v1022 = vpop.f32.mrb[0].mxu0
          %v1023 = vadd.f32 %v934, %v1022
          %v1024 = vpop.f32.mrb[0].mxu0
          %1025 = vmatprep.mubr.f32.mxu0 0.0
          %1026 = vmatmul.mubr.f32.gmra.mrb[0].mxu0 %v902
          %v1027 = vpop.f32.mrb[0].mxu0
          %v1028 = vadd.f32 %v934, %v1027
          %v1029 = vpop.f32.mrb[0].mxu0
          %1030 = vmatprep.mubr.f32.mxu0 0.0
          %1031 = vmatmul.mubr.f32.gmra.mrb[0].mxu0 %v903
          %v1032 = vpop.f32.mrb[0].mxu0
          %v1033 = vadd.f32 %v934, %v1032
          %v1034 = vpop.f32.mrb[0].mxu0
          %1035 = vmatprep.mubr.f32.mxu0 0.0
          %1036 = vmatmul.mubr.f32.gmra.mrb[0].mxu0 %v904
          %v1037 = vpop.f32.mrb[0].mxu0
          %v1038 = vadd.f32 %v934, %v1037
          %v1039 = vpop.f32.mrb[0].mxu0
          %1040 = vmatprep.mubr.f32.mxu0 0.0
          %1041 = vmatmul.mubr.f32.gmra.mrb[0].mxu0 %v905
          %v1042 = vpop.f32.mrb[0].mxu0
          %v1043 = vadd.f32 %v934, %v1042
          %v1044 = vpop.f32.mrb[0].mxu0
          %1045 = vmatprep.mubr.f32.mxu0 0.0
          %1046 = vmatmul.mubr.f32.gmra.mrb[0].mxu0 %v906
          %v1047 = vpop.f32.mrb[0].mxu0
          %v1048 = vadd.f32 %v934, %v1047
          %v1049 = vpop.f32.mrb[0].mxu0
          %1050 = vmatprep.mubr.f32.mxu0 0.0
          %1051 = vmatmul.mubr.f32.gmra.mrb[0].mxu0 %v907
          %v1052 = vpop.f32.mrb[0].mxu0
          %v1053 = vadd.f32 %v934, %v1052
          %v1054 = vpop.f32.mrb[0].mxu0
          %1055 = vmatprep.mubr.f32.mxu0 0.0
          %1056 = vmatmul.mubr.f32.gmra.mrb[0].mxu0 %v908
          %v1057 = vpop.f32.mrb[0].mxu0
          %v1058 = vadd.f32 %v934, %v1057
          %v1059 = vpop.f32.mrb[0].mxu0
          %1060 = vmatprep.mubr.f32.mxu0 0.0
          %1061 = vmatmul.mubr.f32.gmra.mrb[0].mxu0 %v909
          %v1062 = vpop.f32.mrb[0].mxu0
          %v1063 = vadd.f32 %v934, %v1062
          %v1064 = vpop.f32.mrb[0].mxu0
          %1065 = vmatprep.mubr.f32.mxu0 0.0
          %1066 = vmatmul.mubr.f32.gmra.mrb[0].mxu0 %v910
          %v1067 = vpop.f32.mrb[0].mxu0
          %v1068 = vadd.f32 %v934, %v1067
          %v1069 = vpop.f32.mrb[0].mxu0
          %1070 = vmatprep.mubr.f32.mxu0 0.0
          %1071 = vmatmul.mubr.f32.gmra.mrb[0].mxu0 %v911
          %v1072 = vpop.f32.mrb[0].mxu0
          %v1073 = vadd.f32 %v934, %v1072
          %v1074 = vpop.f32.mrb[0].mxu0
          %1075 = vmatprep.mubr.f32.mxu0 0.0
          %1076 = vmatmul.mubr.f32.gmra.mrb[0].mxu0 %v912
          %v1077 = vpop.f32.mrb[0].mxu0
          %v1078 = vadd.f32 %v934, %v1077
          %v1079 = vpop.f32.mrb[0].mxu0
          %1080 = vdwg.mxu0
          %1081 = vst [vmem:[%s477] sm:$0xff] %v1003
          %1082 = vst [vmem:[%s477 + $0x8] sm:$0xff] %v1008
          %1083 = vst [vmem:[%s477 + $0x10] sm:$0xff] %v1013
          %1084 = vst [vmem:[%s477 + $0x18] sm:$0xff] %v1018
          %1085 = vst [vmem:[%s477 + $0x20] sm:$0xff] %v1023
          %1086 = vst [vmem:[%s477 + $0x28] sm:$0xff] %v1028
          %1087 = vst [vmem:[%s477 + $0x30] sm:$0xff] %v1033
          %1088 = vst [vmem:[%s477 + $0x38] sm:$0xff] %v1038
          %1089 = vst [vmem:[%s477 + $0x40] sm:$0xff] %v1043
          %1090 = vst [vmem:[%s477 + $0x48] sm:$0xff] %v1048
          %1091 = vst [vmem:[%s477 + $0x50] sm:$0xff] %v1053
          %1092 = vst [vmem:[%s477 + $0x58] sm:$0xff] %v1058
          %1093 = vst [vmem:[%s477 + $0x60] sm:$0xff] %v1063
          %1094 = vst [vmem:[%s477 + $0x68] sm:$0xff] %v1068
          %1095 = vst [vmem:[%s477 + $0x70] sm:$0xff] %v1073
          %1096 = vst [vmem:[%s477 + $0x78] sm:$0xff] %v1078
        $region105: #{tpu_custom_call.1} parent=80 // pred_fallthru
          _
        %s1097 = sand.u32 %s194, 1
        %s1098 = scalar_lea.sflag [#allocation6], %s1097
        %s1099 = sand.u32 %s194, 1
        %s1100 = smul.addr %s1099, 128
        %s1101 = scalar_lea.vmem [#allocation10], %s1100
        // Predicated region
        $region106: #{tpu_custom_call.1} parent=80 // pred_check
          %p1102 = pneg %p204
        $region107: #{tpu_custom_call.1} parent=80 // pred_check_branch
          %1104 = sbr.rel (%p1102) target = $region109
        $region108: #{tpu_custom_call.1} parent=80 // pred_region
          %s1105 = smul.u32 16, %s30
          %s1107 = ssub.s32 2048, 2048
          %1108 = vsyncadd %s1098, %s1107
          %s1109 = smul.addr %s1105, 128
          %s1110 = scalar_lea.hbm %s6, %s1109
          %s1111 = sshll.u32 %s1101, 4
          %s1112 = int_to_ptr.vmem [resolvable:$true] %s1111
          %1117 = dma.vmem_to_hbm [thread:$0]  %s1112, 2048, %s1110, %s1098, 128, 128, 8
        $region109: #{tpu_custom_call.1} parent=80 // pred_fallthru
          _
      $region81: #{tpu_custom_call.1} parent=5 // pred_fallthru
        _
      %p1118 = scmp.le.s32.totalorder 2, %s21
      // Predicated region
      $region110: #{tpu_custom_call.1} parent=5 // pred_check
        %p1119 = pneg %p1118
      $region111: #{tpu_custom_call.1} parent=5 // pred_check_branch
        %1121 = sbr.rel (%p1119) target = $region113
      $region112: #{tpu_custom_call.1} parent=5 // pred_region
        %s1122 = ssub.s32 %s21, 2
        // Predicated region
        $region114: #{tpu_custom_call.1} parent=112 // pred_check
          %p1123 = pneg %p210
        $region115: #{tpu_custom_call.1} parent=112 // pred_check_branch
          %1125 = sbr.rel (%p1123) target = $region117
        $region116: #{tpu_custom_call.1} parent=112 // pred_region
          %s1126 = sand.u32 %s195, 1
          %s1127 = scalar_lea.sflag [#allocation6], %s1126
          %s1128 = sand.u32 %s195, 1
          %s1129 = smul.addr %s1128, 128
          %s1130 = scalar_lea.vmem [#allocation10], %s1129
          %1131 = dma.done %s1127, 2048
        $region117: #{tpu_custom_call.1} parent=112 // pred_fallthru
          _
      $region113: #{tpu_custom_call.1} parent=5 // pred_fallthru
        _
    $region6: #{tpu_custom_call.1} parent=1 // loop_footer
      %s25 = sadd.s32 1, %s21
    $region7: #{tpu_custom_call.1} parent=1 // loop_footer_branch
      %20 = sbr.rel target = $region3
    $region8: #{tpu_custom_call.1} parent=1 // loop_exit
      _
    %1132 = vsyncpa [#allocation5], 1
    %s1133 = scalar_lea.sflag [#allocation5], 1
    %1134 = vsyncpa %s1133, 1
    %1135 = vsyncpa [#allocation8], 1
    %s1136 = scalar_lea.sflag [#allocation8], 1
    %1137 = vsyncpa %s1136, 1
    %1138 = vsyncpa [#allocation6], 1
    %s1139 = scalar_lea.sflag [#allocation6], 1
    %1140 = vsyncpa %s1139, 1

</llo_original>
